<compile_context>
chip_gen: v5e
topology: v5e:2x2
jax: 0.10.0
libtpu: 0.0.40
codegen_flags: <defaults>
</compile_context>

<pallas_src>
import jax
import jax.numpy as jnp
from jax.experimental import pallas as pl
from jax.experimental.pallas import tpu as pltpu

# module hyperparameters (from the PyTorch script)
HIDDEN_SIZE = 2
INPUT_SIZE = 5
NUM_CLASSES = 1
NUM_LAYERS = 1  # single bidirectional layer


def bilstm_kernel(x2d_ref,       # (T*B, I)   time-major flattened input (row t*B+b = x[b, t, :])
                  wih_cat_ref,   # (I, 8H)    [forward | backward] W_ih^T, concatenated on gate axis
                  b_cat_ref,     # (1, 8H)    [forward | backward] (b_ih + b_hh)
                  whh_f_ref,     # (H, 4H)    forward W_hh^T
                  fc_w_ref,      # (1, 2H)    fc weight laid out as a single row (C == 1)
                  fc_b_ref,      # (1, C)     fc bias
                  out_ref):      # (B, C)
    B = out_ref.shape[0]
    TB = x2d_ref.shape[0]
    T = TB // B
    H = whh_f_ref.shape[0]
    H4 = 4 * H

    # ---- hoisted input projection: ONE MXU matmul for all timesteps & both directions ----
    gates_x = (jnp.dot(x2d_ref[...], wih_cat_ref[...],
                       preferred_element_type=jnp.float32)
               + b_cat_ref[...])                       # (T*B, 8H)

    whh_f = whh_f_ref[...]                             # (H, 4H)

    h = jnp.zeros((B, H), jnp.float32)
    c = jnp.zeros((B, H), jnp.float32)

    # ---- forward recurrence, fully unrolled (T is static) ----
    # per step: 2 VPU broadcast-FMAs for h @ W_hh, 1 sigmoid + 2 tanh on the EUP.
    for t in range(T):
        gates = gates_x[t * B:(t + 1) * B, 0:H4]       # (B, 4H) precomputed x-part
        for j in range(H):                             # h @ W_hh on the VPU (H=2 FMAs)
            gates = gates + h[:, j:j + 1] * whh_f[j:j + 1, :]
        sig = jax.nn.sigmoid(gates)                    # full-width: i, f, o in one EUP pass
        tnh = jnp.tanh(gates)                          # full-width: g in one EUP pass
        i_g = sig[:, 0:H]
        f_g = sig[:, H:2 * H]
        g_g = tnh[:, 2 * H:3 * H]
        o_g = sig[:, 3 * H:4 * H]
        c = f_g * c + i_g * g_g
        h = o_g * jnp.tanh(c)

    # ---- backward direction at t = T-1: single step from zero state ----
    # h0 = c0 = 0 -> no W_hh term and no forget-gate contribution.
    gates_b = gates_x[(T - 1) * B:T * B, H4:2 * H4]    # (B, 4H)
    sig_b = jax.nn.sigmoid(gates_b)
    tnh_b = jnp.tanh(gates_b)
    c_b = sig_b[:, 0:H] * tnh_b[:, 2 * H:3 * H]
    h_b = sig_b[:, 3 * H:4 * H] * jnp.tanh(c_b)

    # ---- fc + relu on the VPU (2H = 4, C = 1): elementwise mults + one lane reduce ----
    fc_w = fc_w_ref[...]                               # (1, 2H)
    contrib = h * fc_w[:, 0:H] + h_b * fc_w[:, H:2 * H]           # (B, H)
    logits = jnp.sum(contrib, axis=-1, keepdims=True) + fc_b_ref[...]   # (B, 1)
    out_ref[...] = jnp.maximum(logits, 0.0)


def init_params(key, input_size=INPUT_SIZE, hidden_size=HIDDEN_SIZE,
                num_classes=NUM_CLASSES):
    """Deterministic synthetic parameters (PyTorch-style U(-1/sqrt(H), 1/sqrt(H)))."""
    H, I, C = hidden_size, input_size, num_classes
    k_lstm = 1.0 / jnp.sqrt(jnp.float32(H))
    keys = jax.random.split(key, 10)

    def u(k, shape, scale):
        return jax.random.uniform(k, shape, jnp.float32, -scale, scale)

    # forward direction
    wih_f = u(keys[0], (I, 4 * H), k_lstm)
    whh_f = u(keys[1], (H, 4 * H), k_lstm)
    b_f = u(keys[2], (1, 4 * H), k_lstm) + u(keys[3], (1, 4 * H), k_lstm)
    # backward direction
    wih_b = u(keys[4], (I, 4 * H), k_lstm)
    whh_b = u(keys[5], (H, 4 * H), k_lstm)
    b_b = u(keys[6], (1, 4 * H), k_lstm) + u(keys[7], (1, 4 * H), k_lstm)
    # fc (the reference defines fc_1 = Linear(2H, C); that is the Linear we implement)
    k_fc = 1.0 / jnp.sqrt(jnp.float32(2 * H))
    fc_w = u(keys[8], (2 * H, C), k_fc)
    fc_b = u(keys[9], (1, C), k_fc)
    return (wih_f, whh_f, b_f, wih_b, whh_b, b_b, fc_w, fc_b)


def bilstm_forward(x, params):
    """x: (B, T, I) batch-first (PyTorch convention). Returns (B, num_classes)."""
    wih_f, whh_f, b_f, wih_b, whh_b, b_b, fc_w, fc_b = params
    B, T, I = x.shape
    H = HIDDEN_SIZE

    # time-major flatten so the kernel does one batched input projection
    x2d = jnp.transpose(x, (1, 0, 2)).reshape(T * B, I).astype(jnp.float32)
    wih_cat = jnp.concatenate([wih_f, wih_b], axis=1)          # (I, 8H)
    b_cat = jnp.concatenate([b_f, b_b], axis=1)                # (1, 8H)
    fc_w_row = fc_w.reshape(1, 2 * H)                          # (1, 2H)  (C == 1)

    vmem_spec = pl.BlockSpec(memory_space=pltpu.MemorySpace.VMEM)
    # TODO(synk): for large batches on v7x, add a batch grid with
    # dimension_semantics=("parallel",) so both TensorCores are used; at B=2 a
    # grid only adds per-step overhead, so the kernel stays gridless.
    out = pl.pallas_call(
        bilstm_kernel,
        out_shape=jax.ShapeDtypeStruct((B, NUM_CLASSES), jnp.float32),
        in_specs=[vmem_spec] * 6,
        out_specs=vmem_spec,
    )(x2d, wih_cat, b_cat, whh_f, fc_w_row, fc_b)
    return out


def bilstm_reference(x, params):
    """Pure-JAX reference for correctness checking (mirrors the PyTorch module)."""
    wih_f, whh_f, b_f, wih_b, whh_b, b_b, fc_w, fc_b = params
    B, T, I = x.shape
    H = HIDDEN_SIZE

    def cell(x_t, h, c, wih, whh, b):
        g = x_t @ wih + h @ whh + b
        i_g = jax.nn.sigmoid(g[:, 0 * H:1 * H])
        f_g = jax.nn.sigmoid(g[:, 1 * H:2 * H])
        g_g = jnp.tanh(g[:, 2 * H:3 * H])
        o_g = jax.nn.sigmoid(g[:, 3 * H:4 * H])
        c_n = f_g * c + i_g * g_g
        return o_g * jnp.tanh(c_n), c_n

    h = jnp.zeros((B, H), jnp.float32)
    c = jnp.zeros((B, H), jnp.float32)
    for t in range(T):
        h, c = cell(x[:, t, :], h, c, wih_f, whh_f, b_f)
    h0 = jnp.zeros((B, H), jnp.float32)
    hb, _ = cell(x[:, T - 1, :], h0, h0, wih_b, whh_b, b_b)
    feat = jnp.concatenate([h, hb], axis=-1)
    return jnp.maximum(feat @ fc_w + fc_b, 0.0)


if __name__ == "__main__":
    key = jax.random.PRNGKey(0)
    k_x, k_p = jax.random.split(key)

    batch, seq_length = 2, 8
    x = jax.random.normal(k_x, (batch, seq_length, INPUT_SIZE), jnp.float32)
    params = init_params(k_p)

    out = bilstm_forward(x, params)
    out = jax.block_until_ready(out)

    ref = bilstm_reference(x, params)
    assert out.shape == (batch, NUM_CLASSES)
    assert jnp.allclose(out, ref, atol=1e-5, rtol=1e-5), (out, ref)

    print("KERNEL_OK")
</pallas_src>

<mosaic_0001>
module attributes {stable_mosaic.version = 11 : i64} {
  func.func @bilstm_kernel(%arg0: memref<16x5xf32, #tpu.memory_space<vmem>>, %arg1: memref<5x16xf32, #tpu.memory_space<vmem>>, %arg2: memref<1x16xf32, #tpu.memory_space<vmem>>, %arg3: memref<2x8xf32, #tpu.memory_space<vmem>>, %arg4: memref<1x4xf32, #tpu.memory_space<vmem>>, %arg5: memref<1x1xf32, #tpu.memory_space<vmem>>, %arg6: memref<2x1xf32, #tpu.memory_space<vmem>>) attributes {dimension_semantics = [], scalar_prefetch = 0 : i64, scratch_operands = 0 : i64, tpu.core_type = #tpu.core_type<tc>} {
    %c0 = arith.constant 0 : index
    %c0_0 = arith.constant 0 : index
    %0 = vector.load %arg0[%c0, %c0_0] : memref<16x5xf32, #tpu.memory_space<vmem>>, vector<16x5xf32>
    %c0_1 = arith.constant 0 : index
    %c0_2 = arith.constant 0 : index
    %1 = vector.load %arg1[%c0_1, %c0_2] : memref<5x16xf32, #tpu.memory_space<vmem>>, vector<5x16xf32>
    %cst = arith.constant dense<0.000000e+00> : vector<16x16xf32>
    %2 = tpu.matmul %0, %1, %cst {dimension_numbers = #tpu.dot_dimension_numbers<[1], [0], [0], [1], [0, 0, 1, 1], [], []>} : vector<16x5xf32>, vector<5x16xf32>, vector<16x16xf32> -> vector<16x16xf32>
    %c0_3 = arith.constant 0 : index
    %c0_4 = arith.constant 0 : index
    %3 = vector.load %arg2[%c0_3, %c0_4] : memref<1x16xf32, #tpu.memory_space<vmem>>, vector<1x16xf32>
    %4 = vector.broadcast %3 : vector<1x16xf32> to vector<16x16xf32>
    %5 = arith.addf %2, %4 : vector<16x16xf32>
    %c0_5 = arith.constant 0 : index
    %c0_6 = arith.constant 0 : index
    %6 = vector.load %arg3[%c0_5, %c0_6] : memref<2x8xf32, #tpu.memory_space<vmem>>, vector<2x8xf32>
    %cst_7 = arith.constant 0.000000e+00 : f32
    %7 = vector.broadcast %cst_7 : f32 to vector<2x2xf32>
    %cst_8 = arith.constant 0.000000e+00 : f32
    %8 = vector.broadcast %cst_8 : f32 to vector<2x2xf32>
    %9 = vector.extract_strided_slice %5 {offsets = [0, 0], sizes = [2, 8], strides = [1, 1]} : vector<16x16xf32> to vector<2x8xf32>
    %10 = vector.extract_strided_slice %7 {offsets = [0, 0], sizes = [2, 1], strides = [1, 1]} : vector<2x2xf32> to vector<2x1xf32>
    %11 = vector.extract_strided_slice %6 {offsets = [0, 0], sizes = [1, 8], strides = [1, 1]} : vector<2x8xf32> to vector<1x8xf32>
    %12 = vector.broadcast %10 : vector<2x1xf32> to vector<2x8xf32>
    %13 = vector.broadcast %11 : vector<1x8xf32> to vector<2x8xf32>
    %14 = arith.mulf %12, %13 : vector<2x8xf32>
    %15 = arith.addf %9, %14 : vector<2x8xf32>
    %16 = vector.extract_strided_slice %7 {offsets = [0, 1], sizes = [2, 1], strides = [1, 1]} : vector<2x2xf32> to vector<2x1xf32>
    %17 = vector.extract_strided_slice %6 {offsets = [1, 0], sizes = [1, 8], strides = [1, 1]} : vector<2x8xf32> to vector<1x8xf32>
    %18 = vector.broadcast %16 : vector<2x1xf32> to vector<2x8xf32>
    %19 = vector.broadcast %17 : vector<1x8xf32> to vector<2x8xf32>
    %20 = arith.mulf %18, %19 : vector<2x8xf32>
    %21 = arith.addf %15, %20 : vector<2x8xf32>
    %22 = arith.negf %21 : vector<2x8xf32>
    %23 = math.exp %22 : vector<2x8xf32>
    %cst_9 = arith.constant 1.000000e+00 : f32
    %24 = vector.broadcast %cst_9 : f32 to vector<2x8xf32>
    %25 = arith.addf %24, %23 : vector<2x8xf32>
    %26 = arith.divf %24, %25 : vector<2x8xf32>
    %27 = math.tanh %21 : vector<2x8xf32>
    %28 = vector.extract_strided_slice %26 {offsets = [0, 0], sizes = [2, 2], strides = [1, 1]} : vector<2x8xf32> to vector<2x2xf32>
    %29 = vector.extract_strided_slice %26 {offsets = [0, 2], sizes = [2, 2], strides = [1, 1]} : vector<2x8xf32> to vector<2x2xf32>
    %30 = vector.extract_strided_slice %27 {offsets = [0, 4], sizes = [2, 2], strides = [1, 1]} : vector<2x8xf32> to vector<2x2xf32>
    %31 = vector.extract_strided_slice %26 {offsets = [0, 6], sizes = [2, 2], strides = [1, 1]} : vector<2x8xf32> to vector<2x2xf32>
    %32 = arith.mulf %29, %8 : vector<2x2xf32>
    %33 = arith.mulf %28, %30 : vector<2x2xf32>
    %34 = arith.addf %32, %33 : vector<2x2xf32>
    %35 = math.tanh %34 : vector<2x2xf32>
    %36 = arith.mulf %31, %35 : vector<2x2xf32>
    %37 = vector.extract_strided_slice %5 {offsets = [2, 0], sizes = [2, 8], strides = [1, 1]} : vector<16x16xf32> to vector<2x8xf32>
    %38 = vector.extract_strided_slice %36 {offsets = [0, 0], sizes = [2, 1], strides = [1, 1]} : vector<2x2xf32> to vector<2x1xf32>
    %39 = vector.extract_strided_slice %6 {offsets = [0, 0], sizes = [1, 8], strides = [1, 1]} : vector<2x8xf32> to vector<1x8xf32>
    %40 = vector.broadcast %38 : vector<2x1xf32> to vector<2x8xf32>
    %41 = vector.broadcast %39 : vector<1x8xf32> to vector<2x8xf32>
    %42 = arith.mulf %40, %41 : vector<2x8xf32>
    %43 = arith.addf %37, %42 : vector<2x8xf32>
    %44 = vector.extract_strided_slice %36 {offsets = [0, 1], sizes = [2, 1], strides = [1, 1]} : vector<2x2xf32> to vector<2x1xf32>
    %45 = vector.extract_strided_slice %6 {offsets = [1, 0], sizes = [1, 8], strides = [1, 1]} : vector<2x8xf32> to vector<1x8xf32>
    %46 = vector.broadcast %44 : vector<2x1xf32> to vector<2x8xf32>
    %47 = vector.broadcast %45 : vector<1x8xf32> to vector<2x8xf32>
    %48 = arith.mulf %46, %47 : vector<2x8xf32>
    %49 = arith.addf %43, %48 : vector<2x8xf32>
    %50 = arith.negf %49 : vector<2x8xf32>
    %51 = math.exp %50 : vector<2x8xf32>
    %cst_10 = arith.constant 1.000000e+00 : f32
    %52 = vector.broadcast %cst_10 : f32 to vector<2x8xf32>
    %53 = arith.addf %52, %51 : vector<2x8xf32>
    %54 = arith.divf %52, %53 : vector<2x8xf32>
    %55 = math.tanh %49 : vector<2x8xf32>
    %56 = vector.extract_strided_slice %54 {offsets = [0, 0], sizes = [2, 2], strides = [1, 1]} : vector<2x8xf32> to vector<2x2xf32>
    %57 = vector.extract_strided_slice %54 {offsets = [0, 2], sizes = [2, 2], strides = [1, 1]} : vector<2x8xf32> to vector<2x2xf32>
    %58 = vector.extract_strided_slice %55 {offsets = [0, 4], sizes = [2, 2], strides = [1, 1]} : vector<2x8xf32> to vector<2x2xf32>
    %59 = vector.extract_strided_slice %54 {offsets = [0, 6], sizes = [2, 2], strides = [1, 1]} : vector<2x8xf32> to vector<2x2xf32>
    %60 = arith.mulf %57, %34 : vector<2x2xf32>
    %61 = arith.mulf %56, %58 : vector<2x2xf32>
    %62 = arith.addf %60, %61 : vector<2x2xf32>
    %63 = math.tanh %62 : vector<2x2xf32>
    %64 = arith.mulf %59, %63 : vector<2x2xf32>
    %65 = vector.extract_strided_slice %5 {offsets = [4, 0], sizes = [2, 8], strides = [1, 1]} : vector<16x16xf32> to vector<2x8xf32>
    %66 = vector.extract_strided_slice %64 {offsets = [0, 0], sizes = [2, 1], strides = [1, 1]} : vector<2x2xf32> to vector<2x1xf32>
    %67 = vector.extract_strided_slice %6 {offsets = [0, 0], sizes = [1, 8], strides = [1, 1]} : vector<2x8xf32> to vector<1x8xf32>
    %68 = vector.broadcast %66 : vector<2x1xf32> to vector<2x8xf32>
    %69 = vector.broadcast %67 : vector<1x8xf32> to vector<2x8xf32>
    %70 = arith.mulf %68, %69 : vector<2x8xf32>
    %71 = arith.addf %65, %70 : vector<2x8xf32>
    %72 = vector.extract_strided_slice %64 {offsets = [0, 1], sizes = [2, 1], strides = [1, 1]} : vector<2x2xf32> to vector<2x1xf32>
    %73 = vector.extract_strided_slice %6 {offsets = [1, 0], sizes = [1, 8], strides = [1, 1]} : vector<2x8xf32> to vector<1x8xf32>
    %74 = vector.broadcast %72 : vector<2x1xf32> to vector<2x8xf32>
    %75 = vector.broadcast %73 : vector<1x8xf32> to vector<2x8xf32>
    %76 = arith.mulf %74, %75 : vector<2x8xf32>
    %77 = arith.addf %71, %76 : vector<2x8xf32>
    %78 = arith.negf %77 : vector<2x8xf32>
    %79 = math.exp %78 : vector<2x8xf32>
    %cst_11 = arith.constant 1.000000e+00 : f32
    %80 = vector.broadcast %cst_11 : f32 to vector<2x8xf32>
    %81 = arith.addf %80, %79 : vector<2x8xf32>
    %82 = arith.divf %80, %81 : vector<2x8xf32>
    %83 = math.tanh %77 : vector<2x8xf32>
    %84 = vector.extract_strided_slice %82 {offsets = [0, 0], sizes = [2, 2], strides = [1, 1]} : vector<2x8xf32> to vector<2x2xf32>
    %85 = vector.extract_strided_slice %82 {offsets = [0, 2], sizes = [2, 2], strides = [1, 1]} : vector<2x8xf32> to vector<2x2xf32>
    %86 = vector.extract_strided_slice %83 {offsets = [0, 4], sizes = [2, 2], strides = [1, 1]} : vector<2x8xf32> to vector<2x2xf32>
    %87 = vector.extract_strided_slice %82 {offsets = [0, 6], sizes = [2, 2], strides = [1, 1]} : vector<2x8xf32> to vector<2x2xf32>
    %88 = arith.mulf %85, %62 : vector<2x2xf32>
    %89 = arith.mulf %84, %86 : vector<2x2xf32>
    %90 = arith.addf %88, %89 : vector<2x2xf32>
    %91 = math.tanh %90 : vector<2x2xf32>
    %92 = arith.mulf %87, %91 : vector<2x2xf32>
    %93 = vector.extract_strided_slice %5 {offsets = [6, 0], sizes = [2, 8], strides = [1, 1]} : vector<16x16xf32> to vector<2x8xf32>
    %94 = vector.extract_strided_slice %92 {offsets = [0, 0], sizes = [2, 1], strides = [1, 1]} : vector<2x2xf32> to vector<2x1xf32>
    %95 = vector.extract_strided_slice %6 {offsets = [0, 0], sizes = [1, 8], strides = [1, 1]} : vector<2x8xf32> to vector<1x8xf32>
    %96 = vector.broadcast %94 : vector<2x1xf32> to vector<2x8xf32>
    %97 = vector.broadcast %95 : vector<1x8xf32> to vector<2x8xf32>
    %98 = arith.mulf %96, %97 : vector<2x8xf32>
    %99 = arith.addf %93, %98 : vector<2x8xf32>
    %100 = vector.extract_strided_slice %92 {offsets = [0, 1], sizes = [2, 1], strides = [1, 1]} : vector<2x2xf32> to vector<2x1xf32>
    %101 = vector.extract_strided_slice %6 {offsets = [1, 0], sizes = [1, 8], strides = [1, 1]} : vector<2x8xf32> to vector<1x8xf32>
    %102 = vector.broadcast %100 : vector<2x1xf32> to vector<2x8xf32>
    %103 = vector.broadcast %101 : vector<1x8xf32> to vector<2x8xf32>
    %104 = arith.mulf %102, %103 : vector<2x8xf32>
    %105 = arith.addf %99, %104 : vector<2x8xf32>
    %106 = arith.negf %105 : vector<2x8xf32>
    %107 = math.exp %106 : vector<2x8xf32>
    %cst_12 = arith.constant 1.000000e+00 : f32
    %108 = vector.broadcast %cst_12 : f32 to vector<2x8xf32>
    %109 = arith.addf %108, %107 : vector<2x8xf32>
    %110 = arith.divf %108, %109 : vector<2x8xf32>
    %111 = math.tanh %105 : vector<2x8xf32>
    %112 = vector.extract_strided_slice %110 {offsets = [0, 0], sizes = [2, 2], strides = [1, 1]} : vector<2x8xf32> to vector<2x2xf32>
    %113 = vector.extract_strided_slice %110 {offsets = [0, 2], sizes = [2, 2], strides = [1, 1]} : vector<2x8xf32> to vector<2x2xf32>
    %114 = vector.extract_strided_slice %111 {offsets = [0, 4], sizes = [2, 2], strides = [1, 1]} : vector<2x8xf32> to vector<2x2xf32>
    %115 = vector.extract_strided_slice %110 {offsets = [0, 6], sizes = [2, 2], strides = [1, 1]} : vector<2x8xf32> to vector<2x2xf32>
    %116 = arith.mulf %113, %90 : vector<2x2xf32>
    %117 = arith.mulf %112, %114 : vector<2x2xf32>
    %118 = arith.addf %116, %117 : vector<2x2xf32>
    %119 = math.tanh %118 : vector<2x2xf32>
    %120 = arith.mulf %115, %119 : vector<2x2xf32>
    %121 = vector.extract_strided_slice %5 {offsets = [8, 0], sizes = [2, 8], strides = [1, 1]} : vector<16x16xf32> to vector<2x8xf32>
    %122 = vector.extract_strided_slice %120 {offsets = [0, 0], sizes = [2, 1], strides = [1, 1]} : vector<2x2xf32> to vector<2x1xf32>
    %123 = vector.extract_strided_slice %6 {offsets = [0, 0], sizes = [1, 8], strides = [1, 1]} : vector<2x8xf32> to vector<1x8xf32>
    %124 = vector.broadcast %122 : vector<2x1xf32> to vector<2x8xf32>
    %125 = vector.broadcast %123 : vector<1x8xf32> to vector<2x8xf32>
    %126 = arith.mulf %124, %125 : vector<2x8xf32>
    %127 = arith.addf %121, %126 : vector<2x8xf32>
    %128 = vector.extract_strided_slice %120 {offsets = [0, 1], sizes = [2, 1], strides = [1, 1]} : vector<2x2xf32> to vector<2x1xf32>
    %129 = vector.extract_strided_slice %6 {offsets = [1, 0], sizes = [1, 8], strides = [1, 1]} : vector<2x8xf32> to vector<1x8xf32>
    %130 = vector.broadcast %128 : vector<2x1xf32> to vector<2x8xf32>
    %131 = vector.broadcast %129 : vector<1x8xf32> to vector<2x8xf32>
    %132 = arith.mulf %130, %131 : vector<2x8xf32>
    %133 = arith.addf %127, %132 : vector<2x8xf32>
    %134 = arith.negf %133 : vector<2x8xf32>
    %135 = math.exp %134 : vector<2x8xf32>
    %cst_13 = arith.constant 1.000000e+00 : f32
    %136 = vector.broadcast %cst_13 : f32 to vector<2x8xf32>
    %137 = arith.addf %136, %135 : vector<2x8xf32>
    %138 = arith.divf %136, %137 : vector<2x8xf32>
    %139 = math.tanh %133 : vector<2x8xf32>
    %140 = vector.extract_strided_slice %138 {offsets = [0, 0], sizes = [2, 2], strides = [1, 1]} : vector<2x8xf32> to vector<2x2xf32>
    %141 = vector.extract_strided_slice %138 {offsets = [0, 2], sizes = [2, 2], strides = [1, 1]} : vector<2x8xf32> to vector<2x2xf32>
    %142 = vector.extract_strided_slice %139 {offsets = [0, 4], sizes = [2, 2], strides = [1, 1]} : vector<2x8xf32> to vector<2x2xf32>
    %143 = vector.extract_strided_slice %138 {offsets = [0, 6], sizes = [2, 2], strides = [1, 1]} : vector<2x8xf32> to vector<2x2xf32>
    %144 = arith.mulf %141, %118 : vector<2x2xf32>
    %145 = arith.mulf %140, %142 : vector<2x2xf32>
    %146 = arith.addf %144, %145 : vector<2x2xf32>
    %147 = math.tanh %146 : vector<2x2xf32>
    %148 = arith.mulf %143, %147 : vector<2x2xf32>
    %149 = vector.extract_strided_slice %5 {offsets = [10, 0], sizes = [2, 8], strides = [1, 1]} : vector<16x16xf32> to vector<2x8xf32>
    %150 = vector.extract_strided_slice %148 {offsets = [0, 0], sizes = [2, 1], strides = [1, 1]} : vector<2x2xf32> to vector<2x1xf32>
    %151 = vector.extract_strided_slice %6 {offsets = [0, 0], sizes = [1, 8], strides = [1, 1]} : vector<2x8xf32> to vector<1x8xf32>
    %152 = vector.broadcast %150 : vector<2x1xf32> to vector<2x8xf32>
    %153 = vector.broadcast %151 : vector<1x8xf32> to vector<2x8xf32>
    %154 = arith.mulf %152, %153 : vector<2x8xf32>
    %155 = arith.addf %149, %154 : vector<2x8xf32>
    %156 = vector.extract_strided_slice %148 {offsets = [0, 1], sizes = [2, 1], strides = [1, 1]} : vector<2x2xf32> to vector<2x1xf32>
    %157 = vector.extract_strided_slice %6 {offsets = [1, 0], sizes = [1, 8], strides = [1, 1]} : vector<2x8xf32> to vector<1x8xf32>
    %158 = vector.broadcast %156 : vector<2x1xf32> to vector<2x8xf32>
    %159 = vector.broadcast %157 : vector<1x8xf32> to vector<2x8xf32>
    %160 = arith.mulf %158, %159 : vector<2x8xf32>
    %161 = arith.addf %155, %160 : vector<2x8xf32>
    %162 = arith.negf %161 : vector<2x8xf32>
    %163 = math.exp %162 : vector<2x8xf32>
    %cst_14 = arith.constant 1.000000e+00 : f32
    %164 = vector.broadcast %cst_14 : f32 to vector<2x8xf32>
    %165 = arith.addf %164, %163 : vector<2x8xf32>
    %166 = arith.divf %164, %165 : vector<2x8xf32>
    %167 = math.tanh %161 : vector<2x8xf32>
    %168 = vector.extract_strided_slice %166 {offsets = [0, 0], sizes = [2, 2], strides = [1, 1]} : vector<2x8xf32> to vector<2x2xf32>
    %169 = vector.extract_strided_slice %166 {offsets = [0, 2], sizes = [2, 2], strides = [1, 1]} : vector<2x8xf32> to vector<2x2xf32>
    %170 = vector.extract_strided_slice %167 {offsets = [0, 4], sizes = [2, 2], strides = [1, 1]} : vector<2x8xf32> to vector<2x2xf32>
    %171 = vector.extract_strided_slice %166 {offsets = [0, 6], sizes = [2, 2], strides = [1, 1]} : vector<2x8xf32> to vector<2x2xf32>
    %172 = arith.mulf %169, %146 : vector<2x2xf32>
    %173 = arith.mulf %168, %170 : vector<2x2xf32>
    %174 = arith.addf %172, %173 : vector<2x2xf32>
    %175 = math.tanh %174 : vector<2x2xf32>
    %176 = arith.mulf %171, %175 : vector<2x2xf32>
    %177 = vector.extract_strided_slice %5 {offsets = [12, 0], sizes = [2, 8], strides = [1, 1]} : vector<16x16xf32> to vector<2x8xf32>
    %178 = vector.extract_strided_slice %176 {offsets = [0, 0], sizes = [2, 1], strides = [1, 1]} : vector<2x2xf32> to vector<2x1xf32>
    %179 = vector.extract_strided_slice %6 {offsets = [0, 0], sizes = [1, 8], strides = [1, 1]} : vector<2x8xf32> to vector<1x8xf32>
    %180 = vector.broadcast %178 : vector<2x1xf32> to vector<2x8xf32>
    %181 = vector.broadcast %179 : vector<1x8xf32> to vector<2x8xf32>
    %182 = arith.mulf %180, %181 : vector<2x8xf32>
    %183 = arith.addf %177, %182 : vector<2x8xf32>
    %184 = vector.extract_strided_slice %176 {offsets = [0, 1], sizes = [2, 1], strides = [1, 1]} : vector<2x2xf32> to vector<2x1xf32>
    %185 = vector.extract_strided_slice %6 {offsets = [1, 0], sizes = [1, 8], strides = [1, 1]} : vector<2x8xf32> to vector<1x8xf32>
    %186 = vector.broadcast %184 : vector<2x1xf32> to vector<2x8xf32>
    %187 = vector.broadcast %185 : vector<1x8xf32> to vector<2x8xf32>
    %188 = arith.mulf %186, %187 : vector<2x8xf32>
    %189 = arith.addf %183, %188 : vector<2x8xf32>
    %190 = arith.negf %189 : vector<2x8xf32>
    %191 = math.exp %190 : vector<2x8xf32>
    %cst_15 = arith.constant 1.000000e+00 : f32
    %192 = vector.broadcast %cst_15 : f32 to vector<2x8xf32>
    %193 = arith.addf %192, %191 : vector<2x8xf32>
    %194 = arith.divf %192, %193 : vector<2x8xf32>
    %195 = math.tanh %189 : vector<2x8xf32>
    %196 = vector.extract_strided_slice %194 {offsets = [0, 0], sizes = [2, 2], strides = [1, 1]} : vector<2x8xf32> to vector<2x2xf32>
    %197 = vector.extract_strided_slice %194 {offsets = [0, 2], sizes = [2, 2], strides = [1, 1]} : vector<2x8xf32> to vector<2x2xf32>
    %198 = vector.extract_strided_slice %195 {offsets = [0, 4], sizes = [2, 2], strides = [1, 1]} : vector<2x8xf32> to vector<2x2xf32>
    %199 = vector.extract_strided_slice %194 {offsets = [0, 6], sizes = [2, 2], strides = [1, 1]} : vector<2x8xf32> to vector<2x2xf32>
    %200 = arith.mulf %197, %174 : vector<2x2xf32>
    %201 = arith.mulf %196, %198 : vector<2x2xf32>
    %202 = arith.addf %200, %201 : vector<2x2xf32>
    %203 = math.tanh %202 : vector<2x2xf32>
    %204 = arith.mulf %199, %203 : vector<2x2xf32>
    %205 = vector.extract_strided_slice %5 {offsets = [14, 0], sizes = [2, 8], strides = [1, 1]} : vector<16x16xf32> to vector<2x8xf32>
    %206 = vector.extract_strided_slice %204 {offsets = [0, 0], sizes = [2, 1], strides = [1, 1]} : vector<2x2xf32> to vector<2x1xf32>
    %207 = vector.extract_strided_slice %6 {offsets = [0, 0], sizes = [1, 8], strides = [1, 1]} : vector<2x8xf32> to vector<1x8xf32>
    %208 = vector.broadcast %206 : vector<2x1xf32> to vector<2x8xf32>
    %209 = vector.broadcast %207 : vector<1x8xf32> to vector<2x8xf32>
    %210 = arith.mulf %208, %209 : vector<2x8xf32>
    %211 = arith.addf %205, %210 : vector<2x8xf32>
    %212 = vector.extract_strided_slice %204 {offsets = [0, 1], sizes = [2, 1], strides = [1, 1]} : vector<2x2xf32> to vector<2x1xf32>
    %213 = vector.extract_strided_slice %6 {offsets = [1, 0], sizes = [1, 8], strides = [1, 1]} : vector<2x8xf32> to vector<1x8xf32>
    %214 = vector.broadcast %212 : vector<2x1xf32> to vector<2x8xf32>
    %215 = vector.broadcast %213 : vector<1x8xf32> to vector<2x8xf32>
    %216 = arith.mulf %214, %215 : vector<2x8xf32>
    %217 = arith.addf %211, %216 : vector<2x8xf32>
    %218 = arith.negf %217 : vector<2x8xf32>
    %219 = math.exp %218 : vector<2x8xf32>
    %cst_16 = arith.constant 1.000000e+00 : f32
    %220 = vector.broadcast %cst_16 : f32 to vector<2x8xf32>
    %221 = arith.addf %220, %219 : vector<2x8xf32>
    %222 = arith.divf %220, %221 : vector<2x8xf32>
    %223 = math.tanh %217 : vector<2x8xf32>
    %224 = vector.extract_strided_slice %222 {offsets = [0, 0], sizes = [2, 2], strides = [1, 1]} : vector<2x8xf32> to vector<2x2xf32>
    %225 = vector.extract_strided_slice %222 {offsets = [0, 2], sizes = [2, 2], strides = [1, 1]} : vector<2x8xf32> to vector<2x2xf32>
    %226 = vector.extract_strided_slice %223 {offsets = [0, 4], sizes = [2, 2], strides = [1, 1]} : vector<2x8xf32> to vector<2x2xf32>
    %227 = vector.extract_strided_slice %222 {offsets = [0, 6], sizes = [2, 2], strides = [1, 1]} : vector<2x8xf32> to vector<2x2xf32>
    %228 = arith.mulf %225, %202 : vector<2x2xf32>
    %229 = arith.mulf %224, %226 : vector<2x2xf32>
    %230 = arith.addf %228, %229 : vector<2x2xf32>
    %231 = math.tanh %230 : vector<2x2xf32>
    %232 = arith.mulf %227, %231 : vector<2x2xf32>
    %233 = vector.extract_strided_slice %5 {offsets = [14, 8], sizes = [2, 8], strides = [1, 1]} : vector<16x16xf32> to vector<2x8xf32>
    %234 = arith.negf %233 : vector<2x8xf32>
    %235 = math.exp %234 : vector<2x8xf32>
    %cst_17 = arith.constant 1.000000e+00 : f32
    %236 = vector.broadcast %cst_17 : f32 to vector<2x8xf32>
    %237 = arith.addf %236, %235 : vector<2x8xf32>
    %238 = arith.divf %236, %237 : vector<2x8xf32>
    %239 = math.tanh %233 : vector<2x8xf32>
    %240 = vector.extract_strided_slice %238 {offsets = [0, 0], sizes = [2, 2], strides = [1, 1]} : vector<2x8xf32> to vector<2x2xf32>
    %241 = vector.extract_strided_slice %239 {offsets = [0, 4], sizes = [2, 2], strides = [1, 1]} : vector<2x8xf32> to vector<2x2xf32>
    %242 = arith.mulf %240, %241 : vector<2x2xf32>
    %243 = vector.extract_strided_slice %238 {offsets = [0, 6], sizes = [2, 2], strides = [1, 1]} : vector<2x8xf32> to vector<2x2xf32>
    %244 = math.tanh %242 : vector<2x2xf32>
    %245 = arith.mulf %243, %244 : vector<2x2xf32>
    %c0_18 = arith.constant 0 : index
    %c0_19 = arith.constant 0 : index
    %246 = vector.load %arg4[%c0_18, %c0_19] : memref<1x4xf32, #tpu.memory_space<vmem>>, vector<1x4xf32>
    %247 = vector.extract_strided_slice %246 {offsets = [0, 0], sizes = [1, 2], strides = [1, 1]} : vector<1x4xf32> to vector<1x2xf32>
    %248 = vector.broadcast %247 : vector<1x2xf32> to vector<2x2xf32>
    %249 = arith.mulf %232, %248 : vector<2x2xf32>
    %250 = vector.extract_strided_slice %246 {offsets = [0, 2], sizes = [1, 2], strides = [1, 1]} : vector<1x4xf32> to vector<1x2xf32>
    %251 = vector.broadcast %250 : vector<1x2xf32> to vector<2x2xf32>
    %252 = arith.mulf %245, %251 : vector<2x2xf32>
    %253 = arith.addf %249, %252 : vector<2x2xf32>
    %cst_20 = arith.constant dense<0.000000e+00> : vector<2xf32>
    %254 = vector.multi_reduction <add>, %253, %cst_20 [1] : vector<2x2xf32> to vector<2xf32>
    %255 = vector.shape_cast %254 : vector<2xf32> to vector<2x1xf32>
    %c0_21 = arith.constant 0 : index
    %c0_22 = arith.constant 0 : index
    %256 = vector.load %arg5[%c0_21, %c0_22] : memref<1x1xf32, #tpu.memory_space<vmem>>, vector<1x1xf32>
    %257 = vector.broadcast %256 : vector<1x1xf32> to vector<2x1xf32>
    %258 = arith.addf %255, %257 : vector<2x1xf32>
    %cst_23 = arith.constant 0.000000e+00 : f32
    %259 = vector.broadcast %cst_23 : f32 to vector<2x1xf32>
    %260 = arith.maximumf %258, %259 : vector<2x1xf32>
    %c0_24 = arith.constant 0 : index
    %c0_25 = arith.constant 0 : index
    %261 = vector.load %arg6[%c0_24, %c0_25] : memref<2x1xf32, #tpu.memory_space<vmem>>, vector<2x1xf32>
    tpu.vector_store %arg6[%c0_24, %c0_25], %260 {strides = array<i32>} : memref<2x1xf32, #tpu.memory_space<vmem>>, vector<2x1xf32>,
    return
  }
}

</mosaic_0001>

<llo_original>
// kernel: tpu_custom_call.1
$region0: #{tpu_custom_call.1}
  #allocation0 [shape = 'u32[]', space=smem, size = 0x4, offset = 0x4, fixed_abs, tag = 'smem constant byte address 0x4 - core index']
  #allocation1 [shape = 'u32[72,128]{1,0:T(1,128)}', space=vmem, size = 0x9000, scoped, tag = 'internal scratch']
  #allocation2 [shape = 'f32[1,1]{1,0:T(1,128)S(1)}', space=vmem, size = 0x200, scoped, tag = 'scoped memory for tpu_custom_call.1']
  %s0 = inlined_call_operand.vmem [shape: f32[16,5], index: 0, kind: input, shape index: {}]
  %s1 = inlined_call_operand.vmem [shape: f32[5,16], index: 1, kind: input, shape index: {}]
  %s2 = inlined_call_operand.vmem [shape: f32[1,16], index: 2, kind: input, shape index: {}]
  %s3 = inlined_call_operand.vmem [shape: f32[2,8], index: 3, kind: input, shape index: {}]
  %s4 = inlined_call_operand.vmem [shape: f32[1,4], index: 4, kind: input, shape index: {}]
  %s5 = inlined_call_operand.<no memory space> [shape: f32[1,1], index: 5, kind: input, shape index: {}]
  %s6 = inlined_call_operand.vmem [shape: f32[2,1], index: 6, kind: output, shape index: {}]
  %s7 = sld [smem:[#allocation0]]
  $region34: #{tpu_custom_call.1} parent=0
    _
  %s9 = ssub.s32 1, %s7
  %s10 = scalar_select 0, %s9, %s7
  %v11 = vstv %s5
  %12 = vst [vmem:[#allocation2] sm:$0x1] %v11
  // Predicated region
  $region2: #{tpu_custom_call.1} parent=0 // pred_check
    _
  $region3: #{tpu_custom_call.1} parent=0 // pred_check_branch
    %14 = sbr.rel (0) target = $region5
  $region4: #{tpu_custom_call.1} parent=0 // pred_region
    _
  $region5: #{tpu_custom_call.1} parent=0 // pred_fallthru
    _
  // Predicated region
  $region6: #{tpu_custom_call.1} parent=0 // pred_check
    _
  $region7: #{tpu_custom_call.1} parent=0 // pred_check_branch
    %16 = sbr.rel (0) target = $region9
  $region8: #{tpu_custom_call.1} parent=0 // pred_region
    _
  $region9: #{tpu_custom_call.1} parent=0 // pred_fallthru
    _
  // Predicated region
  $region10: #{tpu_custom_call.1} parent=0 // pred_check
    _
  $region11: #{tpu_custom_call.1} parent=0 // pred_check_branch
    %18 = sbr.rel (0) target = $region13
  $region12: #{tpu_custom_call.1} parent=0 // pred_region
    _
  $region13: #{tpu_custom_call.1} parent=0 // pred_fallthru
    _
  // Predicated region
  $region14: #{tpu_custom_call.1} parent=0 // pred_check
    _
  $region15: #{tpu_custom_call.1} parent=0 // pred_check_branch
    %20 = sbr.rel (0) target = $region17
  $region16: #{tpu_custom_call.1} parent=0 // pred_region
    _
  $region17: #{tpu_custom_call.1} parent=0 // pred_fallthru
    _
  // Predicated region
  $region18: #{tpu_custom_call.1} parent=0 // pred_check
    _
  $region19: #{tpu_custom_call.1} parent=0 // pred_check_branch
    %22 = sbr.rel (0) target = $region21
  $region20: #{tpu_custom_call.1} parent=0 // pred_region
    _
  $region21: #{tpu_custom_call.1} parent=0 // pred_fallthru
    _
  // Predicated region
  $region22: #{tpu_custom_call.1} parent=0 // pred_check
    _
  $region23: #{tpu_custom_call.1} parent=0 // pred_check_branch
    %24 = sbr.rel (0) target = $region25
  $region24: #{tpu_custom_call.1} parent=0 // pred_region
    _
  $region25: #{tpu_custom_call.1} parent=0 // pred_fallthru
    _
  %v25 = vld [vmem:[%s0] sm:$0xff]
  %v26 = vld [vmem:[%s0 + $0x8] sm:$0xff]
  %v27 = vld [vmem:[%s1] sm:$0x1f]
  %v28 = vld [vmem:[%s2] sm:$0x1]
  %v30 = vperm.slane %v28, 0
  %vm32 = vcmask 39936
  %v34 = vsel %vm32, %v25, 0
  %v37 = vsel %vm32, %v26, 0
  %vm39 = vcmask 1044480
  %v41 = vsel %vm39, %v27, 0
  %43 = vmatpush.msra.mxu0 0.0
  %44 = vmatpush.msra.mxu0 0.0
  %45 = vmatpush.msra.mxu0 0.0
  %46 = vmatpush.msra.mxu0 0.0
  %47 = vmatpush.msra.mxu0 0.0
  %48 = vmatpush.msra.mxu0 0.0
  %49 = vmatpush.msra.mxu0 0.0
  %50 = vmatpush.msra.mxu0 0.0
  %51 = vmatpush.msra.mxu0 0.0
  %52 = vmatpush.msra.mxu0 0.0
  %53 = vmatpush.msra.mxu0 0.0
  %54 = vmatpush.msra.mxu0 0.0
  %55 = vmatpush.msra.mxu0 0.0
  %56 = vmatpush.msra.mxu0 0.0
  %57 = vmatpush.msra.mxu0 0.0
  %58 = vmatpush.msra.mxu0 %v41
  %59 = vmatmul.f32.gmra.mxu0 %v34
  %v60 = vpop.f32.mrf.mxu0
  %v61 = vadd.f32 %v30, %v60
  %62 = vmatmul.f32.gmra.mxu0 %v37
  %v63 = vpop.f32.mrf.mxu0
  %v64 = vadd.f32 %v30, %v63
  %65 = vdwg.mxu0
  %v66 = vld [vmem:[%s3] sm:$0x3]
  %v67 = vperm.slane %v66, 0
  %v68 = vmul.f32 %v67, 0.0
  %v69 = vadd.f32 %v61, %v68
  %v70 = vperm.slane %v66, 1
  %v71 = vmul.f32 %v70, 0.0
  %v72 = vadd.f32 %v69, %v71
  %v73 = vxor.u32 %v72, 2147483648
  %v74 = vmul.f32 %v73, 1.442695
  %v75 = vpow.pop %v74
  %v76 = vadd.f32 %v75, 1.0
  %v77 = vrcp.pop %v76
  %v78 = vmul.f32 %v76, %v77
  %v79 = vsub.f32 1.0, %v78
  %v80 = vmul.f32 %v77, %v79
  %v81 = vadd.f32 %v77, %v80
  %vm82 = vweird.f32 %v76
  %vm83 = vweird.f32 %v77
  %vm84 = vmor %vm82, %vm83
  %v85 = vsel %vm84, %v77, %v81
  %v86 = vand.u32 2147483647, %v76
  %vm87 = vcmp.eq.f32.partialorder %v86, 8.507059e+37
  %v88 = vand.u32 %v76, 2147483648
  %v89 = vor.u32 1.1754944e-38, %v88
  %v90 = vsel %vm87, %v89, %v85
  %v91 = vmul.f32 1.0, %v90
  %v92 = vtanh.pop %v72
  %v93 = vmul.f32 %v91, 0.0
  %95 = vrot.lane.b32.xlu0 %v92, 124
  %v96 = vpop.permute.xlu0 %95
  %v98 = vmul.f32 %v91, %v96
  %100 = vrot.lane.b32.xlu0 %v98, 2
  %v101 = vpop.permute.xlu0 %100
  %v103 = vadd.f32 %v93, %v101
  %v104 = vtanh.pop %v103
  %106 = vrot.lane.b32.xlu0 %v104, 4
  %v107 = vpop.permute.xlu0 %106
  %v109 = vmul.f32 %v91, %v107
  %111 = vset.pattern.permute.xlu0 6
  %112 = vperm.xlu0 %111, %v109
  %v113 = vpop.permute.xlu0 %112
  %v115 = vmul.f32 %v113, %v67
  %v117 = vrot.slane %v115, 6
  %v119 = vadd.f32 %v61, %v117
  %120 = vset.pattern.permute.xlu0 7
  %121 = vperm.xlu0 %120, %v109
  %v122 = vpop.permute.xlu0 %121
  %v124 = vmul.f32 %v122, %v70
  %v126 = vrot.slane %v124, 6
  %v128 = vadd.f32 %v119, %v126
  %v129 = vxor.u32 %v128, 2147483648
  %v130 = vmul.f32 %v129, 1.442695
  %v131 = vpow.pop %v130
  %v132 = vadd.f32 %v131, 1.0
  %v133 = vrcp.pop %v132
  %v134 = vmul.f32 %v132, %v133
  %v135 = vsub.f32 1.0, %v134
  %v136 = vmul.f32 %v133, %v135
  %v137 = vadd.f32 %v133, %v136
  %vm138 = vweird.f32 %v132
  %vm139 = vweird.f32 %v133
  %vm140 = vmor %vm138, %vm139
  %v141 = vsel %vm140, %v133, %v137
  %v142 = vand.u32 2147483647, %v132
  %vm143 = vcmp.eq.f32.partialorder %v142, 8.507059e+37
  %v144 = vand.u32 %v132, 2147483648
  %v145 = vor.u32 1.1754944e-38, %v144
  %v146 = vsel %vm143, %v145, %v141
  %v147 = vmul.f32 1.0, %v146
  %v148 = vtanh.pop %v128
  %v150 = vrot.slane %v103, 6
  %v152 = vmul.f32 %v147, %v150
  %154 = vrot.lane.b32.xlu0 %v148, 124
  %v155 = vpop.permute.xlu0 %154
  %v157 = vmul.f32 %v147, %v155
  %159 = vrot.lane.b32.xlu0 %v157, 2
  %v160 = vpop.permute.xlu0 %159
  %v162 = vadd.f32 %v152, %v160
  %v163 = vtanh.pop %v162
  %165 = vrot.lane.b32.xlu0 %v163, 4
  %v166 = vpop.permute.xlu0 %165
  %v168 = vmul.f32 %v147, %v166
  %170 = vset.pattern.permute.xlu0 6
  %171 = vperm.xlu0 %170, %v168
  %v172 = vpop.permute.xlu0 %171
  %v174 = vmul.f32 %v172, %v67
  %v176 = vrot.slane %v174, 6
  %v178 = vadd.f32 %v61, %v176
  %179 = vset.pattern.permute.xlu0 7
  %180 = vperm.xlu0 %179, %v168
  %v181 = vpop.permute.xlu0 %180
  %v183 = vmul.f32 %v181, %v70
  %v185 = vrot.slane %v183, 6
  %v187 = vadd.f32 %v178, %v185
  %v188 = vxor.u32 %v187, 2147483648
  %v189 = vmul.f32 %v188, 1.442695
  %v190 = vpow.pop %v189
  %v191 = vadd.f32 %v190, 1.0
  %v192 = vrcp.pop %v191
  %v193 = vmul.f32 %v191, %v192
  %v194 = vsub.f32 1.0, %v193
  %v195 = vmul.f32 %v192, %v194
  %v196 = vadd.f32 %v192, %v195
  %vm197 = vweird.f32 %v191
  %vm198 = vweird.f32 %v192
  %vm199 = vmor %vm197, %vm198
  %v200 = vsel %vm199, %v192, %v196
  %v201 = vand.u32 2147483647, %v191
  %vm202 = vcmp.eq.f32.partialorder %v201, 8.507059e+37
  %v203 = vand.u32 %v191, 2147483648
  %v204 = vor.u32 1.1754944e-38, %v203
  %v205 = vsel %vm202, %v204, %v200
  %v206 = vmul.f32 1.0, %v205
  %v207 = vtanh.pop %v187
  %v209 = vrot.slane %v162, 6
  %v211 = vmul.f32 %v206, %v209
  %213 = vrot.lane.b32.xlu0 %v207, 124
  %v214 = vpop.permute.xlu0 %213
  %v216 = vmul.f32 %v206, %v214
  %218 = vrot.lane.b32.xlu0 %v216, 2
  %v219 = vpop.permute.xlu0 %218
  %v221 = vadd.f32 %v211, %v219
  %v222 = vtanh.pop %v221
  %224 = vrot.lane.b32.xlu0 %v222, 4
  %v225 = vpop.permute.xlu0 %224
  %v227 = vmul.f32 %v206, %v225
  %229 = vset.pattern.permute.xlu0 6
  %230 = vperm.xlu0 %229, %v227
  %v231 = vpop.permute.xlu0 %230
  %v233 = vmul.f32 %v231, %v67
  %v235 = vrot.slane %v233, 6
  %v237 = vadd.f32 %v61, %v235
  %238 = vset.pattern.permute.xlu0 7
  %239 = vperm.xlu0 %238, %v227
  %v240 = vpop.permute.xlu0 %239
  %v242 = vmul.f32 %v240, %v70
  %v244 = vrot.slane %v242, 6
  %v246 = vadd.f32 %v237, %v244
  %v247 = vxor.u32 %v246, 2147483648
  %v248 = vmul.f32 %v247, 1.442695
  %v249 = vpow.pop %v248
  %v250 = vadd.f32 %v249, 1.0
  %v251 = vrcp.pop %v250
  %v252 = vmul.f32 %v250, %v251
  %v253 = vsub.f32 1.0, %v252
  %v254 = vmul.f32 %v251, %v253
  %v255 = vadd.f32 %v251, %v254
  %vm256 = vweird.f32 %v250
  %vm257 = vweird.f32 %v251
  %vm258 = vmor %vm256, %vm257
  %v259 = vsel %vm258, %v251, %v255
  %v260 = vand.u32 2147483647, %v250
  %vm261 = vcmp.eq.f32.partialorder %v260, 8.507059e+37
  %v262 = vand.u32 %v250, 2147483648
  %v263 = vor.u32 1.1754944e-38, %v262
  %v264 = vsel %vm261, %v263, %v259
  %v265 = vmul.f32 1.0, %v264
  %v266 = vtanh.pop %v246
  %v268 = vrot.slane %v221, 6
  %v270 = vmul.f32 %v265, %v268
  %272 = vrot.lane.b32.xlu0 %v266, 124
  %v273 = vpop.permute.xlu0 %272
  %v275 = vmul.f32 %v265, %v273
  %277 = vrot.lane.b32.xlu0 %v275, 2
  %v278 = vpop.permute.xlu0 %277
  %v280 = vadd.f32 %v270, %v278
  %v281 = vtanh.pop %v280
  %283 = vrot.lane.b32.xlu0 %v281, 4
  %v284 = vpop.permute.xlu0 %283
  %v286 = vmul.f32 %v265, %v284
  %288 = vset.pattern.permute.xlu0 6
  %289 = vperm.xlu0 %288, %v286
  %v290 = vpop.permute.xlu0 %289
  %v292 = vmul.f32 %v290, %v67
  %v294 = vrot.slane %v292, 6
  %v296 = vadd.f32 %v64, %v294
  %297 = vset.pattern.permute.xlu0 7
  %298 = vperm.xlu0 %297, %v286
  %v299 = vpop.permute.xlu0 %298
  %v301 = vmul.f32 %v299, %v70
  %v303 = vrot.slane %v301, 6
  %v305 = vadd.f32 %v296, %v303
  %v306 = vxor.u32 %v305, 2147483648
  %v307 = vmul.f32 %v306, 1.442695
  %v308 = vpow.pop %v307
  %v309 = vadd.f32 %v308, 1.0
  %v310 = vrcp.pop %v309
  %v311 = vmul.f32 %v309, %v310
  %v312 = vsub.f32 1.0, %v311
  %v313 = vmul.f32 %v310, %v312
  %v314 = vadd.f32 %v310, %v313
  %vm315 = vweird.f32 %v309
  %vm316 = vweird.f32 %v310
  %vm317 = vmor %vm315, %vm316
  %v318 = vsel %vm317, %v310, %v314
  %v319 = vand.u32 2147483647, %v309
  %vm320 = vcmp.eq.f32.partialorder %v319, 8.507059e+37
  %v321 = vand.u32 %v309, 2147483648
  %v322 = vor.u32 1.1754944e-38, %v321
  %v323 = vsel %vm320, %v322, %v318
  %v324 = vmul.f32 1.0, %v323
  %v325 = vtanh.pop %v305
  %v327 = vrot.slane %v280, 6
  %v329 = vmul.f32 %v324, %v327
  %331 = vrot.lane.b32.xlu0 %v325, 124
  %v332 = vpop.permute.xlu0 %331
  %v334 = vmul.f32 %v324, %v332
  %336 = vrot.lane.b32.xlu0 %v334, 2
  %v337 = vpop.permute.xlu0 %336
  %v339 = vadd.f32 %v329, %v337
  %v340 = vtanh.pop %v339
  %342 = vrot.lane.b32.xlu0 %v340, 4
  %v343 = vpop.permute.xlu0 %342
  %v345 = vmul.f32 %v324, %v343
  %347 = vset.pattern.permute.xlu0 6
  %348 = vperm.xlu0 %347, %v345
  %v349 = vpop.permute.xlu0 %348
  %v351 = vmul.f32 %v349, %v67
  %v353 = vrot.slane %v351, 6
  %v355 = vadd.f32 %v64, %v353
  %356 = vset.pattern.permute.xlu0 7
  %357 = vperm.xlu0 %356, %v345
  %v358 = vpop.permute.xlu0 %357
  %v360 = vmul.f32 %v358, %v70
  %v362 = vrot.slane %v360, 6
  %v364 = vadd.f32 %v355, %v362
  %v365 = vxor.u32 %v364, 2147483648
  %v366 = vmul.f32 %v365, 1.442695
  %v367 = vpow.pop %v366
  %v368 = vadd.f32 %v367, 1.0
  %v369 = vrcp.pop %v368
  %v370 = vmul.f32 %v368, %v369
  %v371 = vsub.f32 1.0, %v370
  %v372 = vmul.f32 %v369, %v371
  %v373 = vadd.f32 %v369, %v372
  %vm374 = vweird.f32 %v368
  %vm375 = vweird.f32 %v369
  %vm376 = vmor %vm374, %vm375
  %v377 = vsel %vm376, %v369, %v373
  %v378 = vand.u32 2147483647, %v368
  %vm379 = vcmp.eq.f32.partialorder %v378, 8.507059e+37
  %v380 = vand.u32 %v368, 2147483648
  %v381 = vor.u32 1.1754944e-38, %v380
  %v382 = vsel %vm379, %v381, %v377
  %v383 = vmul.f32 1.0, %v382
  %v384 = vtanh.pop %v364
  %v386 = vrot.slane %v339, 6
  %v388 = vmul.f32 %v383, %v386
  %390 = vrot.lane.b32.xlu0 %v384, 124
  %v391 = vpop.permute.xlu0 %390
  %v393 = vmul.f32 %v383, %v391
  %395 = vrot.lane.b32.xlu0 %v393, 2
  %v396 = vpop.permute.xlu0 %395
  %v398 = vadd.f32 %v388, %v396
  %v399 = vtanh.pop %v398
  %401 = vrot.lane.b32.xlu0 %v399, 4
  %v402 = vpop.permute.xlu0 %401
  %v404 = vmul.f32 %v383, %v402
  %406 = vset.pattern.permute.xlu0 6
  %407 = vperm.xlu0 %406, %v404
  %v408 = vpop.permute.xlu0 %407
  %v410 = vmul.f32 %v408, %v67
  %v412 = vrot.slane %v410, 6
  %v414 = vadd.f32 %v64, %v412
  %415 = vset.pattern.permute.xlu0 7
  %416 = vperm.xlu0 %415, %v404
  %v417 = vpop.permute.xlu0 %416
  %v419 = vmul.f32 %v417, %v70
  %v421 = vrot.slane %v419, 6
  %v423 = vadd.f32 %v414, %v421
  %v424 = vxor.u32 %v423, 2147483648
  %v425 = vmul.f32 %v424, 1.442695
  %v426 = vpow.pop %v425
  %v427 = vadd.f32 %v426, 1.0
  %v428 = vrcp.pop %v427
  %v429 = vmul.f32 %v427, %v428
  %v430 = vsub.f32 1.0, %v429
  %v431 = vmul.f32 %v428, %v430
  %v432 = vadd.f32 %v428, %v431
  %vm433 = vweird.f32 %v427
  %vm434 = vweird.f32 %v428
  %vm435 = vmor %vm433, %vm434
  %v436 = vsel %vm435, %v428, %v432
  %v437 = vand.u32 2147483647, %v427
  %vm438 = vcmp.eq.f32.partialorder %v437, 8.507059e+37
  %v439 = vand.u32 %v427, 2147483648
  %v440 = vor.u32 1.1754944e-38, %v439
  %v441 = vsel %vm438, %v440, %v436
  %v442 = vmul.f32 1.0, %v441
  %v443 = vtanh.pop %v423
  %v445 = vrot.slane %v398, 6
  %v447 = vmul.f32 %v442, %v445
  %449 = vrot.lane.b32.xlu0 %v443, 124
  %v450 = vpop.permute.xlu0 %449
  %v452 = vmul.f32 %v442, %v450
  %454 = vrot.lane.b32.xlu0 %v452, 2
  %v455 = vpop.permute.xlu0 %454
  %v457 = vadd.f32 %v447, %v455
  %v458 = vtanh.pop %v457
  %460 = vrot.lane.b32.xlu0 %v458, 4
  %v461 = vpop.permute.xlu0 %460
  %v463 = vmul.f32 %v442, %v461
  %465 = vset.pattern.permute.xlu0 6
  %466 = vperm.xlu0 %465, %v463
  %v467 = vpop.permute.xlu0 %466
  %v469 = vmul.f32 %v467, %v67
  %v471 = vrot.slane %v469, 6
  %v473 = vadd.f32 %v64, %v471
  %474 = vset.pattern.permute.xlu0 7
  %475 = vperm.xlu0 %474, %v463
  %v476 = vpop.permute.xlu0 %475
  %v478 = vmul.f32 %v476, %v70
  %v480 = vrot.slane %v478, 6
  %v482 = vadd.f32 %v473, %v480
  %v483 = vxor.u32 %v482, 2147483648
  %v484 = vmul.f32 %v483, 1.442695
  %v485 = vpow.pop %v484
  %v486 = vadd.f32 %v485, 1.0
  %v487 = vrcp.pop %v486
  %v488 = vmul.f32 %v486, %v487
  %v489 = vsub.f32 1.0, %v488
  %v490 = vmul.f32 %v487, %v489
  %v491 = vadd.f32 %v487, %v490
  %vm492 = vweird.f32 %v486
  %vm493 = vweird.f32 %v487
  %vm494 = vmor %vm492, %vm493
  %v495 = vsel %vm494, %v487, %v491
  %v496 = vand.u32 2147483647, %v486
  %vm497 = vcmp.eq.f32.partialorder %v496, 8.507059e+37
  %v498 = vand.u32 %v486, 2147483648
  %v499 = vor.u32 1.1754944e-38, %v498
  %v500 = vsel %vm497, %v499, %v495
  %v501 = vmul.f32 1.0, %v500
  %v502 = vtanh.pop %v482
  %v504 = vrot.slane %v457, 6
  %v506 = vmul.f32 %v501, %v504
  %508 = vrot.lane.b32.xlu0 %v502, 124
  %v509 = vpop.permute.xlu0 %508
  %v511 = vmul.f32 %v501, %v509
  %513 = vrot.lane.b32.xlu0 %v511, 2
  %v514 = vpop.permute.xlu0 %513
  %v516 = vadd.f32 %v506, %v514
  %v517 = vtanh.pop %v516
  %519 = vrot.lane.b32.xlu0 %v517, 4
  %v520 = vpop.permute.xlu0 %519
  %v522 = vmul.f32 %v501, %v520
  %v523 = vxor.u32 %v64, 2147483648
  %v524 = vmul.f32 %v523, 1.442695
  %v525 = vpow.pop %v524
  %v526 = vadd.f32 %v525, 1.0
  %v527 = vrcp.pop %v526
  %v528 = vmul.f32 %v526, %v527
  %v529 = vsub.f32 1.0, %v528
  %v530 = vmul.f32 %v527, %v529
  %v531 = vadd.f32 %v527, %v530
  %vm532 = vweird.f32 %v526
  %vm533 = vweird.f32 %v527
  %vm534 = vmor %vm532, %vm533
  %v535 = vsel %vm534, %v527, %v531
  %v536 = vand.u32 2147483647, %v526
  %vm537 = vcmp.eq.f32.partialorder %v536, 8.507059e+37
  %v538 = vand.u32 %v526, 2147483648
  %v539 = vor.u32 1.1754944e-38, %v538
  %v540 = vsel %vm537, %v539, %v535
  %v541 = vmul.f32 1.0, %v540
  %v542 = vtanh.pop %v64
  %544 = vrot.lane.b32.xlu0 %v542, 124
  %v545 = vpop.permute.xlu0 %544
  %v547 = vmul.f32 %v541, %v545
  %v548 = vtanh.pop %v547
  %550 = vrot.lane.b32.xlu0 %v548, 6
  %v551 = vpop.permute.xlu0 %550
  %v553 = vmul.f32 %v541, %v551
  %v554 = vld [vmem:[%s4] sm:$0x1]
  %v556 = vperm.slane %v554, 0
  %557 = vrot.lane.b32.xlu0 %v556, 6
  %v558 = vpop.permute.xlu0 %557
  %v560 = vmul.f32 %v522, %v558
  %561 = vrot.lane.b32.xlu0 %v556, 12
  %v562 = vpop.permute.xlu0 %561
  %v564 = vmul.f32 %v553, %v562
  %566 = vrot.lane.b32.xlu0 %v564, 120
  %v567 = vpop.permute.xlu0 %566
  %v569 = vadd.f32 %v560, %v567
  %571 = vrot.lane.b32.xlu0 %v569, 122
  %v572 = vpop.permute.xlu0 %571
  %vm574 = vcmask 15366
  %v575 = vsel %vm574, %v572, 0.0
  %576 = vadd.xlane.f32.xlu0 %v575
  %v577 = vpop.xlane.xlu0 %576
  %v578 = vld [vmem:[#allocation2] sm:$0x1]
  %v580 = vperm.slane %v578, 0
  %v582 = vadd.f32 %v577, %v580
  %v583 = vmax.f32 %v582, 0.0
  %vm584 = vcmask 7174
  %585 = vst.msk [vmem:[%s6 - $0x6] sm:$0xc0] %vm584, %v583
  // Predicated region
  $region26: #{tpu_custom_call.1} parent=0 // pred_check
    _
  $region27: #{tpu_custom_call.1} parent=0 // pred_check_branch
    %587 = sbr.rel (0) target = $region29
  $region28: #{tpu_custom_call.1} parent=0 // pred_region
    _
  $region29: #{tpu_custom_call.1} parent=0 // pred_fallthru
    _
  // Predicated region
  $region30: #{tpu_custom_call.1} parent=0 // pred_check
    _
  $region31: #{tpu_custom_call.1} parent=0 // pred_check_branch
    %589 = sbr.rel (0) target = $region33
  $region32: #{tpu_custom_call.1} parent=0 // pred_region
    _
  $region33: #{tpu_custom_call.1} parent=0 // pred_fallthru
    _

</llo_original>
